<compile_context>
chip_gen: v6e
topology: v6e:2x2x1
jax: 0.10.0
libtpu: 0.0.40
codegen_flags: <defaults>
</compile_context>

<pallas_src>
import math
from functools import partial

import jax
import jax.numpy as jnp
from jax import lax
from jax.experimental import pallas as pl
from jax.experimental.pallas import tpu as pltpu

_LANE = 128
_BF16_SUBLANE = 16
_MIN_CIN_IMPLICIT = 64   # below this the per-tap MXU contraction is too shallow


def _round_up(x, m):
    return -(-x // m) * m


def _choose_row_tile(oh, row_w, cout):
    """Output rows per tile so (tr * row_w) is a multiple of 128 and the f32
    accumulator (cout x tr*row_w) stays around <= 2 MiB (Cout-aware cap)."""
    base = _LANE // math.gcd(row_w, _LANE)
    target_flat = min(2048, max(_LANE, (2 << 20) // (4 * max(cout, 1))))
    cap = max(1, min(max(1, oh // base), max(1, target_flat // (base * row_w))))
    for mult in range(cap, 0, -1):       # prefer a tile that divides oh exactly
        if oh % (base * mult) == 0:
            return base * mult
    return base * cap


def _vmem_limit(est_bytes):
    # explicit, shape-derived scoped-VMEM limit (default 16/32 MiB is too low
    # for mid-size layers; cap below v7x's 64 MiB physical VMEM).
    return int(min(56 * 2**20, max(24 * 2**20, 2 * est_bytes)))


# ---------------------------------------------------------------------------
# Path A: stride 1, Cin >= _MIN_CIN_IMPLICIT.
# Row-flat padded image (N, Hp*Wp, Cin) stays in HBM; each grid step manually
# DMAs only the (TR + Kh - 1) rows it needs (double-buffered across row
# blocks) and applies the Kh*Kw taps as shifted slices feeding depth-Cin
# NT matmuls accumulated directly in (Cout, TRW) layout.
# ---------------------------------------------------------------------------
def _make_implicit_kernel(kh, kw, wp, cout, trw, tin):
    n_taps = kh * kw

    def kernel(x_hbm, w_ref, s_ref, o_ref, xbuf, sem):
        n = pl.program_id(0)
        rb = pl.program_id(1)
        n_rb = pl.num_programs(1)

        def issue(row_block, slot):
            pltpu.make_async_copy(
                x_hbm.at[n, pl.ds(row_block * trw, tin)],
                xbuf.at[slot], sem.at[slot]).start()

        @pl.when(rb == 0)                   # first row block of this batch
        def _():
            issue(0, 0)

        @pl.when(rb + 1 < n_rb)             # prefetch next row block (same batch)
        def _():
            issue(rb + 1, (rb + 1) & 1)

        cur = rb & 1
        pltpu.make_async_copy(
            x_hbm.at[n, pl.ds(rb * trw, tin)],
            xbuf.at[cur], sem.at[cur]).wait()

        buf = xbuf.at[cur]                  # (TIN, Cin) VMEM view
        acc = None
        for t in range(n_taps):             # static unroll; pure dot chain (MRB-friendly)
            ikh, ikw = t // kw, t % kw
            patch = buf[pl.ds(ikh * wp + ikw, trw), :]            # (TRW, Cin) bf16
            d = lax.dot_general(w_ref[t], patch,
                                dimension_numbers=(((1,), (1,)), ((), ())),
                                preferred_element_type=jnp.float32)  # (Cout, TRW)
            acc = d if acc is None else acc + d
        y = acc + s_ref[...]                # folded BN shift, (Cout, 1) lane-broadcast
        y = y * jax.nn.sigmoid(y)           # SiLU
        o_ref[...] = y.astype(o_ref.dtype)  # lane-dense NCHW tile, no transpose

    return kernel


# ---------------------------------------------------------------------------
# Path B: small Cin and/or strided conv.  Full im2col in the wrapper so the
# whole Kh*Kw*Cin receptive field is one MXU contraction per tile.
# ---------------------------------------------------------------------------
def _make_gemm_kernel():
    def kernel(p_ref, w_ref, s_ref, o_ref):
        # p_ref: (TRW, K) bf16   w_ref: (Cout, K) bf16   s_ref: (Cout, 1) f32
        acc = lax.dot_general(w_ref[...], p_ref[...],
                              dimension_numbers=(((1,), (1,)), ((), ())),
                              preferred_element_type=jnp.float32)   # (Cout, TRW)
        y = acc + s_ref[...]
        y = y * jax.nn.sigmoid(y)
        o_ref[...] = y.astype(o_ref.dtype)
    return kernel


@partial(jax.jit, static_argnames=("stride", "groups", "out_dtype"))
def conv_layer_forward(x_nchw, weight, *, stride=(1, 1), groups=1,
                       gamma=None, beta=None, running_mean=None,
                       running_var=None, eps=1e-5, out_dtype=jnp.bfloat16):
    """ConvLayer.forward: Conv2d(pad=(k-1)//2, bias=False) + BatchNorm2d(eval) + SiLU.

    x_nchw: [N, Cin, H, W], weight: [Cout, Cin, Kh, Kw] -> [N, Cout, OH, OW].
    Output is bf16 by default (pass out_dtype=jnp.float32 for f32 writeback).
    """
    N, Cin, H, W = x_nchw.shape
    Cout, Cin_w, Kh, Kw = weight.shape
    assert groups == 1 and Cin == Cin_w, "groups != 1 not supported"
    if isinstance(stride, int):
        stride = (stride, stride)
    sh, sw = stride
    ph, pw = (Kh - 1) // 2, (Kw - 1) // 2
    OH = (H + 2 * ph - Kh) // sh + 1
    OW = (W + 2 * pw - Kw) // sw + 1

    # --- BatchNorm (eval): scale folds into the weights, shift into the epilogue
    if gamma is None:        gamma = jnp.ones((Cout,), jnp.float32)
    if beta is None:         beta = jnp.zeros((Cout,), jnp.float32)
    if running_mean is None: running_mean = jnp.zeros((Cout,), jnp.float32)
    if running_var is None:  running_var = jnp.ones((Cout,), jnp.float32)
    scale = gamma.astype(jnp.float32) / jnp.sqrt(running_var.astype(jnp.float32) + eps)
    shift2d = (beta.astype(jnp.float32)
               - running_mean.astype(jnp.float32) * scale).reshape(Cout, 1)
    w_folded = weight.astype(jnp.float32) * scale[:, None, None, None]

    x_nhwc = jnp.transpose(x_nchw.astype(jnp.bfloat16), (0, 2, 3, 1))   # [N,H,W,Cin]

    use_implicit = (sh == 1 and sw == 1 and Cin >= _MIN_CIN_IMPLICIT)

    if use_implicit:
        # ---- Path A: implicit im2col, per-row-block manual DMA ----
        # Row stride padded to a bf16 sublane multiple so the kh-tap starts are
        # aligned; trailing (Wp - OW) junk output columns are sliced off below.
        Wp = _round_up(OW + Kw - 1, _BF16_SUBLANE)
        TR = _choose_row_tile(OH, Wp, Cout)
        OH_pad = _round_up(OH, TR)
        TRW = TR * Wp
        n_rb = OH_pad // TR
        TIN = TRW + (Kh - 1) * Wp + (Kw - 1)    # input pixels needed per row block
        Hp = OH_pad + Kh                        # one spare row keeps the last tap in bounds
        xp = jnp.pad(x_nhwc, ((0, 0), (ph, Hp - H - ph), (pw, Wp - W - pw), (0, 0)))
        x_flat = xp.reshape(N, Hp * Wp, Cin)    # bf16, NO Kw expansion in HBM
        w_taps = jnp.transpose(w_folded, (2, 3, 0, 1)).reshape(Kh * Kw, Cout, Cin)
        w_taps = w_taps.astype(jnp.bfloat16)

        est = (2 * TIN * Cin * 2 + 2 * Kh * Kw * Cout * Cin * 2 + 2 * Cout * 4
               + 2 * Cout * TRW * 2 + 4 * Cout * TRW * 4)
        kernel = _make_implicit_kernel(Kh, Kw, Wp, Cout, TRW, TIN)

        out = pl.pallas_call(
            kernel,
            out_shape=jax.ShapeDtypeStruct((N, Cout, OH_pad * Wp), out_dtype),
            grid_spec=pltpu.PrefetchScalarGridSpec(
                num_scalar_prefetch=0,
                grid=(N, n_rb),
                in_specs=[
                    pl.BlockSpec(memory_space=pl.ANY),       # row-flat image stays in HBM
                    # TODO(synk): mark the two grid-invariant operands below with
                    # pipeline_mode=pl.Buffered(1) once single-buffering is reliable,
                    # to reclaim their redundant second VMEM buffer.
                    pl.BlockSpec((Kh * Kw, Cout, Cin), lambda n, rb: (0, 0, 0)),
                    pl.BlockSpec((Cout, 1), lambda n, rb: (0, 0)),
                ],
                out_specs=pl.BlockSpec((None, Cout, TRW), lambda n, rb: (n, 0, rb)),
                scratch_shapes=[
                    pltpu.VMEM((2, TIN, Cin), jnp.bfloat16),  # double-buffered input rows
                    pltpu.SemaphoreType.DMA((2,)),
                ],
            ),
            compiler_params=pltpu.CompilerParams(
                # Batches split across cores; rb stays sequential for the manual
                # double-buffer prologue.
                # TODO(synk): N == 1 on v7x would want an rb-parallel-safe prologue.
                dimension_semantics=("parallel", "arbitrary"),
                vmem_limit_bytes=_vmem_limit(est)),
        )(x_flat, w_taps, shift2d)
        out = out.reshape(N, Cout, OH_pad, Wp)[:, :, :OH, :OW]
    else:
        # ---- Path B: full im2col contraction (small Cin and/or strided) ----
        K = Kh * Kw * Cin
        TR = _choose_row_tile(OH, OW, Cout)
        OH_pad = _round_up(OH, TR)
        TRW = TR * OW
        n_rb = OH_pad // TR
        xp = jnp.pad(x_nhwc, ((0, 0), (ph, ph), (pw, pw), (0, 0)))
        cols = []
        for kh in range(Kh):
            for kw in range(Kw):
                cols.append(xp[:, kh: kh + (OH - 1) * sh + 1: sh,
                               kw: kw + (OW - 1) * sw + 1: sw, :])
        patches = jnp.stack(cols, axis=3).reshape(N, OH * OW, K)
        patches = jnp.pad(patches, ((0, 0), (0, OH_pad * OW - OH * OW), (0, 0)))
        patches = patches.astype(jnp.bfloat16)
        w_mat = jnp.transpose(w_folded, (0, 2, 3, 1)).reshape(Cout, K).astype(jnp.bfloat16)

        est = (2 * TRW * K * 2 + 2 * Cout * K * 2 + 2 * Cout * 4
               + 2 * Cout * TRW * 2 + 4 * Cout * TRW * 4)
        kernel = _make_gemm_kernel()

        out = pl.pallas_call(
            kernel,
            out_shape=jax.ShapeDtypeStruct((N, Cout, OH_pad * OW), out_dtype),
            grid_spec=pltpu.PrefetchScalarGridSpec(
                num_scalar_prefetch=0,
                grid=(N, n_rb),
                in_specs=[
                    pl.BlockSpec((None, TRW, K), lambda n, rb: (n, rb, 0)),
                    pl.BlockSpec((Cout, K), lambda n, rb: (0, 0)),
                    pl.BlockSpec((Cout, 1), lambda n, rb: (0, 0)),
                ],
                out_specs=pl.BlockSpec((None, Cout, TRW), lambda n, rb: (n, 0, rb)),
            ),
            compiler_params=pltpu.CompilerParams(
                dimension_semantics=("parallel", "arbitrary"),
                vmem_limit_bytes=_vmem_limit(est)),
        )(patches, w_mat, shift2d)
        out = out.reshape(N, Cout, OH_pad, OW)[:, :, :OH, :]
    return out


if __name__ == "__main__":
    def _reference(x, w, gamma, beta, rmean, rvar, stride, eps=1e-5):
        # Same bf16-rounded operands the kernel feeds the MXU, f32 accumulation.
        scale = gamma / jnp.sqrt(rvar + eps)
        shift = beta - rmean * scale
        wf = (w * scale[:, None, None, None]).astype(jnp.bfloat16).astype(jnp.float32)
        xf = x.astype(jnp.bfloat16).astype(jnp.float32)
        Kh, Kw = w.shape[2], w.shape[3]
        pad = (((Kh - 1) // 2,) * 2, ((Kw - 1) // 2,) * 2)
        y = jax.lax.conv_general_dilated(
            xf, wf, window_strides=stride, padding=pad,
            dimension_numbers=("NCHW", "OIHW", "NCHW"))
        y = y + shift.reshape(1, -1, 1, 1)
        return y * jax.nn.sigmoid(y)

    key = jax.random.PRNGKey(0)
    cases = [
        # (N, Cin, Cout, H, W, k, stride)
        (2, 4, 8, 16, 16, 3, (1, 1)),     # module default shape: small-Cin GEMM path
        (2, 64, 16, 64, 32, 3, (1, 1)),   # implicit-im2col path (manual per-row-block DMA)
        (1, 4, 8, 16, 16, 3, (2, 2)),     # strided path (row padding exercised)
        (1, 8, 16, 64, 64, 3, (1, 1)),    # GEMM path with multiple row blocks
    ]
    for idx, (N, Cin, Cout, H, W, k, stride) in enumerate(cases):
        key, kx, kw, kg, kb, km, kv = jax.random.split(key, 7)
        x = jax.random.normal(kx, (N, Cin, H, W), jnp.float32)
        w = jax.random.normal(kw, (Cout, Cin, k, k), jnp.float32) / math.sqrt(Cin * k * k)
        gamma = 1.0 + 0.1 * jax.random.normal(kg, (Cout,), jnp.float32)
        beta = 0.1 * jax.random.normal(kb, (Cout,), jnp.float32)
        rmean = 0.05 * jax.random.normal(km, (Cout,), jnp.float32)
        rvar = jax.random.uniform(kv, (Cout,), jnp.float32, 0.5, 1.5)

        out = conv_layer_forward(x, w, stride=stride, gamma=gamma, beta=beta,
                                 running_mean=rmean, running_var=rvar)
        out = jax.block_until_ready(out)

        ref = _reference(x, w, gamma, beta, rmean, rvar, stride)
        OH = (H + 2 * ((k - 1) // 2) - k) // stride[0] + 1
        OW = (W + 2 * ((k - 1) // 2) - k) // stride[1] + 1
        assert out.shape == (N, Cout, OH, OW), (idx, out.shape, (N, Cout, OH, OW))
        err = float(jnp.max(jnp.abs(out.astype(jnp.float32) - ref)))
        assert err < 5e-2, f"case {idx}: max abs err {err}"
    print("KERNEL_OK")
</pallas_src>

<mosaic_0001>
module attributes {stable_mosaic.version = 11 : i64} {
  func.func @kernel(%arg0: i32, %arg1: i32, %arg2: memref<1x256x36xbf16, #tpu.memory_space<vmem>>, %arg3: memref<8x36xbf16, #tpu.memory_space<vmem>>, %arg4: memref<8x1xf32, #tpu.memory_space<vmem>>, %arg5: memref<1x8x256xbf16, #tpu.memory_space<vmem>>) attributes {dimension_semantics = [#tpu.dimension_semantics<parallel>, #tpu.dimension_semantics<arbitrary>], iteration_bounds = array<i64: 2, 1>, scalar_prefetch = 0 : i64, scratch_operands = 0 : i64, tpu.core_type = #tpu.core_type<tc>, window_params = [{transform_indices = @transform_0, window_bounds = array<i64: 1, 256, 36>}, {pipeline_mode = #tpu.pipeline_mode<synchronous>, transform_indices = @transform_1, window_bounds = array<i64: 8, 36>}, {pipeline_mode = #tpu.pipeline_mode<synchronous>, transform_indices = @transform_2, window_bounds = array<i64: 8, 1>}, {transform_indices = @transform_3, window_bounds = array<i64: 1, 8, 256>}]} {
    %c0 = arith.constant 0 : index
    %c0_0 = arith.constant 0 : index
    %0 = vector.load %arg3[%c0, %c0_0] : memref<8x36xbf16, #tpu.memory_space<vmem>>, vector<8x36xbf16>
    %c0_1 = arith.constant 0 : index
    %c0_2 = arith.constant 0 : index
    %c0_3 = arith.constant 0 : index
    %1 = vector.load %arg2[%c0_1, %c0_2, %c0_3] : memref<1x256x36xbf16, #tpu.memory_space<vmem>>, vector<1x256x36xbf16>
    %2 = vector.shape_cast %1 : vector<1x256x36xbf16> to vector<256x36xbf16>
    %cst = arith.constant dense<0.000000e+00> : vector<8x256xf32>
    %3 = tpu.matmul %0, %2, %cst {dimension_numbers = #tpu.dot_dimension_numbers<[1], [1], [0], [0], [0, 0, 1, 0], [], []>} : vector<8x36xbf16>, vector<256x36xbf16>, vector<8x256xf32> -> vector<8x256xf32>
    %c0_4 = arith.constant 0 : index
    %c0_5 = arith.constant 0 : index
    %4 = vector.load %arg4[%c0_4, %c0_5] : memref<8x1xf32, #tpu.memory_space<vmem>>, vector<8x1xf32>
    %5 = vector.broadcast %4 : vector<8x1xf32> to vector<8x256xf32>
    %6 = arith.addf %3, %5 : vector<8x256xf32>
    %7 = arith.negf %6 : vector<8x256xf32>
    %8 = math.exp %7 : vector<8x256xf32>
    %cst_6 = arith.constant 1.000000e+00 : f32
    %9 = vector.broadcast %cst_6 : f32 to vector<8x256xf32>
    %10 = arith.addf %9, %8 : vector<8x256xf32>
    %11 = arith.divf %9, %10 : vector<8x256xf32>
    %12 = arith.mulf %6, %11 : vector<8x256xf32>
    %13 = arith.truncf %12 : vector<8x256xf32> to vector<8x256xbf16>
    %c0_7 = arith.constant 0 : index
    %c0_8 = arith.constant 0 : index
    %c0_9 = arith.constant 0 : index
    %14 = vector.load %arg5[%c0_7, %c0_8, %c0_9] : memref<1x8x256xbf16, #tpu.memory_space<vmem>>, vector<1x8x256xbf16>
    %15 = vector.shape_cast %14 : vector<1x8x256xbf16> to vector<8x256xbf16>
    %16 = vector.shape_cast %13 : vector<8x256xbf16> to vector<1x8x256xbf16>
    tpu.vector_store %arg5[%c0_7, %c0_8, %c0_9], %16 {strides = array<i32>} : memref<1x8x256xbf16, #tpu.memory_space<vmem>>, vector<1x8x256xbf16>,
    return
  }
  func.func @transform_0(%arg0: i32, %arg1: i32) -> (i32, i32, i32) {
    %c0_i32 = arith.constant 0 : i32
    %c0_i32_0 = arith.constant 0 : i32
    return %arg0, %arg1, %c0_i32 : i32, i32, i32
  }
  func.func @transform_1(%arg0: i32, %arg1: i32) -> (i32, i32) {
    %c0_i32 = arith.constant 0 : i32
    %c0_i32_0 = arith.constant 0 : i32
    %c0_i32_1 = arith.constant 0 : i32
    return %c0_i32, %c0_i32_0 : i32, i32
  }
  func.func @transform_2(%arg0: i32, %arg1: i32) -> (i32, i32) {
    %c0_i32 = arith.constant 0 : i32
    %c0_i32_0 = arith.constant 0 : i32
    %c0_i32_1 = arith.constant 0 : i32
    return %c0_i32, %c0_i32_0 : i32, i32
  }
  func.func @transform_3(%arg0: i32, %arg1: i32) -> (i32, i32, i32) {
    %c0_i32 = arith.constant 0 : i32
    %c0_i32_0 = arith.constant 0 : i32
    return %arg0, %c0_i32, %arg1 : i32, i32, i32
  }
}

</mosaic_0001>

<llo_original>
// kernel: conv_layer_forward.1
$region0: #{conv_layer_forward.1}
  #allocation0 [shape = 'u32[]', space=smem, size = 0x4, offset = 0x4, fixed_abs, tag = 'smem constant byte address 0x4 - core index']
  #allocation1 [shape = 'u32[144,128]{1,0:T(1,128)}', space=vmem, size = 0x12000, scoped, tag = 'internal scratch']
  %s0 = inlined_call_operand.vmem [shape: bf16[2,256,36], index: 0, kind: input, shape index: {}]
  %s1 = inlined_call_operand.vmem [shape: bf16[8,36], index: 1, kind: input, shape index: {}]
  %s2 = inlined_call_operand.vmem [shape: f32[8,1], index: 2, kind: input, shape index: {}]
  %s3 = inlined_call_operand.vmem [shape: bf16[2,8,256], index: 3, kind: output, shape index: {}]
  %s4 = sld [smem:[#allocation0]]
  $region45: #{conv_layer_forward.1} parent=0
    _
  %s6 = ssub.s32 1, %s4
  %s7 = scalar_select 0, %s6, %s4
  loop: start=0, step=1, limit=4
  $region2: #{conv_layer_forward.1} parent=0 // loop_pre_header
    _
  $region3: #{conv_layer_forward.1} parent=0 // loop_header
    %s9 = sphi 0, %s13
    %p10 = scmp.ge.s32.totalorder %s9, 4
    %s16 = sphi 0, %s28
    %s17 = sphi 0, %s24
    %s18 = sphi 0, %s16
    %s19 = sphi 0, %s17
    %s20 = sphi 0, %s18
    %s21 = sphi 0, %s19
    %s33 = sphi 0, %s35
    %s36 = sphi 0, %s33
    %s37 = sphi 0, %s36
    %s53 = sphi 0, %s37
    %s57 = sphi 0, %s57
    %s59 = sphi 0, %s57
    %s60 = sphi 0, %s59
    %s74 = sphi 0, %s60
    %s78 = sphi 0, %s78
    %s80 = sphi 0, %s78
    %s81 = sphi 0, %s80
    %s95 = sphi 0, %s81
    %s103 = sphi 0, %s105
    %s106 = sphi 0, %s103
    %s107 = sphi 0, %s106
    %s123 = sphi 0, %s107
  $region4: #{conv_layer_forward.1} parent=0 // loop_header_branch
    %12 = sbr.rel (%p10) target = $region8
  $region5: #{conv_layer_forward.1} parent=0 // loop_body
    %s14 = ssub.s32 %s9, 1
    %s15 = ssub.s32 %s9, 2
    %s22 = sadd.s32 1, %s17
    %p23 = scmp.ge.s32.totalorder %s22, 1
    %s24 = scalar_select %p23, 0, %s22
    %s25 = sadd.s32 1, %s16
    %s26 = scalar_select %p23, %s25, %s16
    %p27 = scmp.ge.s32.totalorder %s26, 2
    %s28 = scalar_select %p27, 0, %s26
    %s29 = ssub.s32 %s16, %s28
    %s30 = ssub.s32 %s17, %s24
    %s31 = sor.u32 %s29, %s30
    %p32 = scmp.eq.s32.totalorder %s31, 0
    %s34 = sadd.s32 %s33, 1
    %s35 = scalar_select %p32, %s33, %s34
    %p38 = pneg %p32
    %p39 = scmp.eq.s32.totalorder %s9, 1
    %p40 = por %p38, %p39
    %p41 = scmp.ne.s32.totalorder %s33, %s36
    %p42 = scmp.eq.s32.totalorder %s9, 0
    %p43 = por %p41, %p42
    %p44 = scmp.ne.s32.totalorder %s33, %s36
    %p45 = scmp.eq.s32.totalorder %s14, 1
    %p46 = por %p44, %p45
    %p47 = scmp.ne.s32.totalorder %s36, %s37
    %p48 = scmp.eq.s32.totalorder %s14, 0
    %p49 = por %p47, %p48
    %p50 = scmp.ne.s32.totalorder %s36, %s37
    %p51 = scmp.eq.s32.totalorder %s15, 1
    %p52 = por %p50, %p51
    %p54 = scmp.ne.s32.totalorder %s37, %s53
    %p55 = scmp.eq.s32.totalorder %s15, 0
    %p56 = por %p54, %p55
    %s58 = sadd.s32 %s57, 1
    %p61 = scmp.eq.s32.totalorder %s9, 1
    %p62 = scmp.ne.s32.totalorder %s57, %s59
    %p63 = scmp.eq.s32.totalorder %s9, 0
    %p64 = por %p62, %p63
    %p65 = scmp.ne.s32.totalorder %s57, %s59
    %p66 = scmp.eq.s32.totalorder %s14, 1
    %p67 = por %p65, %p66
    %p68 = scmp.ne.s32.totalorder %s59, %s60
    %p69 = scmp.eq.s32.totalorder %s14, 0
    %p70 = por %p68, %p69
    %p71 = scmp.ne.s32.totalorder %s59, %s60
    %p72 = scmp.eq.s32.totalorder %s15, 1
    %p73 = por %p71, %p72
    %p75 = scmp.ne.s32.totalorder %s60, %s74
    %p76 = scmp.eq.s32.totalorder %s15, 0
    %p77 = por %p75, %p76
    %s79 = sadd.s32 %s78, 1
    %p82 = scmp.eq.s32.totalorder %s9, 1
    %p83 = scmp.ne.s32.totalorder %s78, %s80
    %p84 = scmp.eq.s32.totalorder %s9, 0
    %p85 = por %p83, %p84
    %p86 = scmp.ne.s32.totalorder %s78, %s80
    %p87 = scmp.eq.s32.totalorder %s14, 1
    %p88 = por %p86, %p87
    %p89 = scmp.ne.s32.totalorder %s80, %s81
    %p90 = scmp.eq.s32.totalorder %s14, 0
    %p91 = por %p89, %p90
    %p92 = scmp.ne.s32.totalorder %s80, %s81
    %p93 = scmp.eq.s32.totalorder %s15, 1
    %p94 = por %p92, %p93
    %p96 = scmp.ne.s32.totalorder %s81, %s95
    %p97 = scmp.eq.s32.totalorder %s15, 0
    %p98 = por %p96, %p97
    %s99 = ssub.s32 %s16, %s28
    %s100 = ssub.s32 %s17, %s24
    %s101 = sor.u32 %s99, %s100
    %p102 = scmp.eq.s32.totalorder %s101, 0
    %s104 = sadd.s32 %s103, 1
    %s105 = scalar_select %p102, %s103, %s104
    %p108 = pneg %p102
    %p109 = scmp.eq.s32.totalorder %s9, 1
    %p110 = por %p108, %p109
    %p111 = scmp.ne.s32.totalorder %s103, %s106
    %p112 = scmp.eq.s32.totalorder %s9, 0
    %p113 = por %p111, %p112
    %p114 = scmp.ne.s32.totalorder %s103, %s106
    %p115 = scmp.eq.s32.totalorder %s14, 1
    %p116 = por %p114, %p115
    %p117 = scmp.ne.s32.totalorder %s106, %s107
    %p118 = scmp.eq.s32.totalorder %s14, 0
    %p119 = por %p117, %p118
    %p120 = scmp.ne.s32.totalorder %s106, %s107
    %p121 = scmp.eq.s32.totalorder %s15, 1
    %p122 = por %p120, %p121
    %p124 = scmp.ne.s32.totalorder %s107, %s123
    %p125 = scmp.eq.s32.totalorder %s15, 0
    %p126 = por %p124, %p125
    %p127 = scmp.le.s32.totalorder 1, %s9
    %p128 = scmp.lt.s32.totalorder %s9, 3
    %p129 = pnand %p127, %p128
    %p130 = pneg %p129
    // Predicated region
    $region9: #{conv_layer_forward.1} parent=5 // pred_check
      _
    $region10: #{conv_layer_forward.1} parent=5 // pred_check_branch
      %132 = sbr.rel (%p129) target = $region12
    $region11: #{conv_layer_forward.1} parent=5 // pred_region
      %s133 = ssub.s32 %s9, 1
      // Predicated region
      $region13: #{conv_layer_forward.1} parent=11 // pred_check
        %p134 = pneg %p70
      $region14: #{conv_layer_forward.1} parent=11 // pred_check_branch
        %136 = sbr.rel (%p134) target = $region16
      $region15: #{conv_layer_forward.1} parent=11 // pred_region
        _
      $region16: #{conv_layer_forward.1} parent=11 // pred_fallthru
        _
      // Predicated region
      $region17: #{conv_layer_forward.1} parent=11 // pred_check
        %p137 = pneg %p91
      $region18: #{conv_layer_forward.1} parent=11 // pred_check_branch
        %139 = sbr.rel (%p137) target = $region20
      $region19: #{conv_layer_forward.1} parent=11 // pred_region
        _
      $region20: #{conv_layer_forward.1} parent=11 // pred_fallthru
        _
    $region12: #{conv_layer_forward.1} parent=5 // pred_fallthru
      _
    %p140 = scmp.lt.s32.totalorder %s9, 2
    // Predicated region
    $region21: #{conv_layer_forward.1} parent=5 // pred_check
      %p141 = pneg %p140
    $region22: #{conv_layer_forward.1} parent=5 // pred_check_branch
      %143 = sbr.rel (%p141) target = $region24
    $region23: #{conv_layer_forward.1} parent=5 // pred_region
      // Predicated region
      $region25: #{conv_layer_forward.1} parent=23 // pred_check
        %p144 = pneg %p43
      $region26: #{conv_layer_forward.1} parent=23 // pred_check_branch
        %146 = sbr.rel (%p144) target = $region28
      $region27: #{conv_layer_forward.1} parent=23 // pred_region
        %s147 = smul.u32 32, %s17
        %p148 = scmp.lt.s32.totalorder %s16, 1
        %s149 = scalar_select %p148, %s16, 1
        %p150 = scmp.lt.s32.totalorder %s147, 31
        %s151 = scalar_select %p150, %s147, 31
        %s152 = smul.addr %s149, 32
        %s153 = sadd.s32 %s151, %s152
        %s154 = smul.addr %s153, 4
        %s155 = scalar_lea.vmem %s0, %s154
        %s156 = smul.u32 32, %s17
      $region28: #{conv_layer_forward.1} parent=23 // pred_fallthru
        _
    $region24: #{conv_layer_forward.1} parent=5 // pred_fallthru
      _
    %p157 = scmp.le.s32.totalorder 1, %s9
    %p158 = scmp.lt.s32.totalorder %s9, 3
    %p159 = pnand %p157, %p158
    %p160 = pneg %p159
    // Predicated region
    $region29: #{conv_layer_forward.1} parent=5 // pred_check
      _
    $region30: #{conv_layer_forward.1} parent=5 // pred_check_branch
      %162 = sbr.rel (%p159) target = $region32
    $region31: #{conv_layer_forward.1} parent=5 // pred_region
      %s163 = ssub.s32 %s9, 1
      %s164 = smul.u32 32, %s19
      %p165 = scmp.lt.s32.totalorder %s18, 1
      %s166 = scalar_select %p165, %s18, 1
      %p167 = scmp.lt.s32.totalorder %s164, 31
      %s168 = scalar_select %p167, %s164, 31
      %s169 = smul.addr %s166, 32
      %s170 = sadd.s32 %s168, %s169
      %s171 = smul.addr %s170, 4
      %s172 = scalar_lea.vmem %s0, %s171
      %p173 = pneg %p49
      %p174 = pneg %p46
      %p175 = pneg %p70
      %p176 = pneg %p67
      %p177 = pneg %p91
      %p178 = pneg %p88
      %p179 = pneg %p119
      %p180 = pneg %p116
      %s181 = smul.u32 2, %s19
      %p182 = scmp.lt.s32.totalorder %s18, 1
      %s183 = scalar_select %p182, %s18, 1
      %p184 = scmp.lt.s32.totalorder %s181, 1
      %s185 = scalar_select %p184, %s181, 1
      %s186 = smul.addr %s183, 2
      %s187 = sadd.s32 %s185, %s186
      %s188 = smul.addr %s187, 4
      %s189 = scalar_lea.vmem %s3, %s188
      %s190 = smul.u32 32, %s19
      %p191 = scmp.lt.s32.totalorder %s18, 1
      %s192 = scalar_select %p191, %s18, 1
      %p193 = scmp.lt.s32.totalorder %s190, 31
      %s194 = scalar_select %p193, %s190, 31
      %s195 = smul.addr %s192, 32
      %s196 = sadd.s32 %s194, %s195
      %s197 = smul.addr %s196, 4
      %s198 = scalar_lea.vmem %s0, %s197
      %s199 = smul.u32 32, %s19
      %s200 = smul.u32 2, %s19
      %p201 = scmp.lt.s32.totalorder %s18, 1
      %s202 = scalar_select %p201, %s18, 1
      %p203 = scmp.lt.s32.totalorder %s200, 1
      %s204 = scalar_select %p203, %s200, 1
      %s205 = smul.addr %s202, 2
      %s206 = sadd.s32 %s204, %s205
      %s207 = smul.addr %s206, 4
      %s208 = scalar_lea.vmem %s3, %s207
      %s209 = smul.u32 2, %s19
      %v211 = vld [vmem:[%s1] sm:$0xf]
      %v212 = vld [vmem:[%s198] sm:$0xf]
      %v213 = vld [vmem:[%s198 + $0x4] sm:$0xf]
      %v214 = vld [vmem:[%s198 + $0x8] sm:$0xf]
      %v215 = vld [vmem:[%s198 + $0xc] sm:$0xf]
      %v216 = vld [vmem:[%s198 + $0x10] sm:$0xf]
      %v217 = vld [vmem:[%s198 + $0x14] sm:$0xf]
      %v218 = vld [vmem:[%s198 + $0x18] sm:$0xf]
      %v219 = vld [vmem:[%s198 + $0x1c] sm:$0xf]
      %v220 = vld [vmem:[%s198 + $0x20] sm:$0xf]
      %v221 = vld [vmem:[%s198 + $0x24] sm:$0xf]
      %v222 = vld [vmem:[%s198 + $0x28] sm:$0xf]
      %v223 = vld [vmem:[%s198 + $0x2c] sm:$0xf]
      %v224 = vld [vmem:[%s198 + $0x30] sm:$0xf]
      %v225 = vld [vmem:[%s198 + $0x34] sm:$0xf]
      %v226 = vld [vmem:[%s198 + $0x38] sm:$0xf]
      %v227 = vld [vmem:[%s198 + $0x3c] sm:$0xf]
      %v228 = vld [vmem:[%s198 + $0x40] sm:$0xf]
      %v229 = vld [vmem:[%s198 + $0x44] sm:$0xf]
      %v230 = vld [vmem:[%s198 + $0x48] sm:$0xf]
      %v231 = vld [vmem:[%s198 + $0x4c] sm:$0xf]
      %v232 = vld [vmem:[%s198 + $0x50] sm:$0xf]
      %v233 = vld [vmem:[%s198 + $0x54] sm:$0xf]
      %v234 = vld [vmem:[%s198 + $0x58] sm:$0xf]
      %v235 = vld [vmem:[%s198 + $0x5c] sm:$0xf]
      %v236 = vld [vmem:[%s198 + $0x60] sm:$0xf]
      %v237 = vld [vmem:[%s198 + $0x64] sm:$0xf]
      %v238 = vld [vmem:[%s198 + $0x68] sm:$0xf]
      %v239 = vld [vmem:[%s198 + $0x6c] sm:$0xf]
      %v240 = vld [vmem:[%s198 + $0x70] sm:$0xf]
      %v241 = vld [vmem:[%s198 + $0x74] sm:$0xf]
      %v242 = vld [vmem:[%s198 + $0x78] sm:$0xf]
      %v243 = vld [vmem:[%s198 + $0x7c] sm:$0xf]
      %v244 = vld [vmem:[%s2] sm:$0xff]
      %246 = vset.pattern.permute.xlu0 0
      %247 = vperm.xlu0 %246, %v244
      %v248 = vpop.permute.xlu0 %247
      %v282 = vunpack.c.l.b16 %v212
      %v283 = vunpack.c.l.b16 %v213
      %v284 = vunpack.c.l.b16 %v214
      %v285 = vunpack.c.l.b16 %v215
      %v286 = vunpack.c.l.b16 %v216
      %v287 = vunpack.c.l.b16 %v217
      %v288 = vunpack.c.l.b16 %v218
      %v289 = vunpack.c.l.b16 %v219
      %v290 = vunpack.c.l.b16 %v220
      %v291 = vunpack.c.l.b16 %v221
      %v292 = vunpack.c.l.b16 %v222
      %v293 = vunpack.c.l.b16 %v223
      %v294 = vunpack.c.l.b16 %v224
      %v295 = vunpack.c.l.b16 %v225
      %v296 = vunpack.c.l.b16 %v226
      %v297 = vunpack.c.l.b16 %v227
      %v298 = vunpack.c.l.b16 %v228
      %v299 = vunpack.c.l.b16 %v229
      %v300 = vunpack.c.l.b16 %v230
      %v301 = vunpack.c.l.b16 %v231
      %v302 = vunpack.c.l.b16 %v232
      %v303 = vunpack.c.l.b16 %v233
      %v304 = vunpack.c.l.b16 %v234
      %v305 = vunpack.c.l.b16 %v235
      %v306 = vunpack.c.l.b16 %v236
      %v307 = vunpack.c.l.b16 %v237
      %v308 = vunpack.c.l.b16 %v238
      %v309 = vunpack.c.l.b16 %v239
      %v310 = vunpack.c.l.b16 %v240
      %v311 = vunpack.c.l.b16 %v241
      %v312 = vunpack.c.l.b16 %v242
      %v313 = vunpack.c.l.b16 %v243
      %v314 = vpack.c.b16 %v283, %v282
      %v315 = vpack.c.b16 %v285, %v284
      %v316 = vpack.c.b16 %v287, %v286
      %v317 = vpack.c.b16 %v289, %v288
      %v318 = vpack.c.b16 %v291, %v290
      %v319 = vpack.c.b16 %v293, %v292
      %v320 = vpack.c.b16 %v295, %v294
      %v321 = vpack.c.b16 %v297, %v296
      %v322 = vpack.c.b16 %v299, %v298
      %v323 = vpack.c.b16 %v301, %v300
      %v324 = vpack.c.b16 %v303, %v302
      %v325 = vpack.c.b16 %v305, %v304
      %v326 = vpack.c.b16 %v307, %v306
      %v327 = vpack.c.b16 %v309, %v308
      %v328 = vpack.c.b16 %v311, %v310
      %v329 = vpack.c.b16 %v313, %v312
      %vm330 = vcmask 293888
      %v332 = vsel %vm330, %v211, 0
      %v335 = vsel %vm330, %v314, 0
      %v338 = vsel %vm330, %v315, 0
      %v341 = vsel %vm330, %v316, 0
      %v344 = vsel %vm330, %v317, 0
      %v347 = vsel %vm330, %v318, 0
      %v350 = vsel %vm330, %v319, 0
      %v353 = vsel %vm330, %v320, 0
      %v356 = vsel %vm330, %v321, 0
      %v359 = vsel %vm330, %v322, 0
      %v362 = vsel %vm330, %v323, 0
      %v365 = vsel %vm330, %v324, 0
      %v368 = vsel %vm330, %v325, 0
      %v371 = vsel %vm330, %v326, 0
      %v374 = vsel %vm330, %v327, 0
      %v377 = vsel %vm330, %v328, 0
      %v380 = vsel %vm330, %v329, 0
      %382 = vmatprep.subr.bf16.mxu0 0
      %383 = vmatpush1.bf16.xpose.msra.mxu0 %v356
      %384 = vmatprep.subr.bf16.mxu0 0
      %385 = vmatpush1.bf16.xpose.msra.mxu0 %v353
      %386 = vmatprep.subr.bf16.mxu0 0
      %387 = vmatpush1.bf16.xpose.msra.mxu0 %v350
      %388 = vmatprep.subr.bf16.mxu0 0
      %389 = vmatpush1.bf16.xpose.msra.mxu0 %v347
      %390 = vmatprep.subr.bf16.mxu0 0
      %391 = vmatpush1.bf16.xpose.msra.mxu0 %v344
      %392 = vmatprep.subr.bf16.mxu0 0
      %393 = vmatpush1.bf16.xpose.msra.mxu0 %v341
      %394 = vmatprep.subr.bf16.mxu0 0
      %395 = vmatpush1.bf16.xpose.msra.mxu0 %v338
      %396 = vmatprep.subr.bf16.mxu0 0
      %397 = vmatpush1.bf16.xpose.msra.mxu0 %v335
      %398 = vmatprep.subr.bf16.mxu0 0
      %399 = vmatpush2.bf16.xpose.msra.mxu0 %v380
      %400 = vmatprep.subr.bf16.mxu0 0
      %401 = vmatpush2.bf16.xpose.msra.mxu0 %v377
      %402 = vmatprep.subr.bf16.mxu0 0
      %403 = vmatpush2.bf16.xpose.msra.mxu0 %v374
      %404 = vmatprep.subr.bf16.mxu0 0
      %405 = vmatpush2.bf16.xpose.msra.mxu0 %v371
      %406 = vmatprep.subr.bf16.mxu0 0
      %407 = vmatpush2.bf16.xpose.msra.mxu0 %v368
      %408 = vmatprep.subr.bf16.mxu0 0
      %409 = vmatpush2.bf16.xpose.msra.mxu0 %v365
      %410 = vmatprep.subr.bf16.mxu0 0
      %411 = vmatpush2.bf16.xpose.msra.mxu0 %v362
      %412 = vmatprep.subr.bf16.mxu0 0
      %413 = vmatpush2.bf16.xpose.msra.mxu0 %v359
      %414 = vmatprep.mubr.bf16.mxu0 0
      %415 = vmatmul.mubr.bf16.gmra.mxu0 %v332
      %v416 = vpop.f32.mrf.mxu0
      %v417 = vadd.f32 %v248, %v416
      %v418 = vpop.f32.mrf.mxu0
      %v419 = vadd.f32 %v248, %v418
      %v420 = vpop.f32.mrf.mxu0
      %v421 = vpop.f32.mrf.mxu0
      %422 = vdwg.mxu0
      %v423 = vxor.u32 %v417, 2147483648
      %v424 = vxor.u32 %v419, 2147483648
      %v425 = vmul.f32 %v423, 1.442695
      %v426 = vpow.pop %v425
      %v427 = vmul.f32 %v424, 1.442695
      %v428 = vpow.pop %v427
      %v429 = vadd.f32 %v426, 1.0
      %v430 = vadd.f32 %v428, 1.0
      %v431 = vrcp.pop %v429
      %v432 = vmul.f32 1.0, %v431
      %v433 = vrcp.pop %v430
      %v434 = vmul.f32 1.0, %v433
      %v435 = vmul.f32 %v417, %v432
      %v436 = vmul.f32 %v419, %v434
      %v437 = vpack.c.bf16 %v435, %v435
      %v438 = vpack.c.bf16 %v436, %v436
      %v441 = vunpack.c.l.b16 %v437
      %v442 = vunpack.c.l.b16 %v438
      %v443 = vpack.c.b16 %v442, %v441
      %445 = vst [vmem:[%s208] sm:$0xff] %v443
      %s446 = smul.u32 2, %s19
      %p447 = scmp.lt.s32.totalorder %s18, 1
      %s448 = scalar_select %p447, %s18, 1
      %p449 = scmp.lt.s32.totalorder %s446, 1
      %s450 = scalar_select %p449, %s446, 1
      %s451 = smul.addr %s448, 2
      %s452 = sadd.s32 %s450, %s451
      %s453 = smul.addr %s452, 4
      %s454 = scalar_lea.vmem %s3, %s453
      // Predicated region
      $region33: #{conv_layer_forward.1} parent=31 // pred_check
        %p455 = pneg %p116
      $region34: #{conv_layer_forward.1} parent=31 // pred_check_branch
        %457 = sbr.rel (%p455) target = $region36
      $region35: #{conv_layer_forward.1} parent=31 // pred_region
        %s458 = smul.u32 2, %s19
      $region36: #{conv_layer_forward.1} parent=31 // pred_fallthru
        _
    $region32: #{conv_layer_forward.1} parent=5 // pred_fallthru
      _
    %p459 = scmp.le.s32.totalorder 2, %s9
    // Predicated region
    $region37: #{conv_layer_forward.1} parent=5 // pred_check
      %p460 = pneg %p459
    $region38: #{conv_layer_forward.1} parent=5 // pred_check_branch
      %462 = sbr.rel (%p460) target = $region40
    $region39: #{conv_layer_forward.1} parent=5 // pred_region
      %s463 = ssub.s32 %s9, 2
      // Predicated region
      $region41: #{conv_layer_forward.1} parent=39 // pred_check
        %p464 = pneg %p122
      $region42: #{conv_layer_forward.1} parent=39 // pred_check_branch
        %466 = sbr.rel (%p464) target = $region44
      $region43: #{conv_layer_forward.1} parent=39 // pred_region
        %s467 = smul.u32 2, %s21
        %p468 = scmp.lt.s32.totalorder %s20, 1
        %s469 = scalar_select %p468, %s20, 1
        %p470 = scmp.lt.s32.totalorder %s467, 1
        %s471 = scalar_select %p470, %s467, 1
        %s472 = smul.addr %s469, 2
        %s473 = sadd.s32 %s471, %s472
        %s474 = smul.addr %s473, 4
        %s475 = scalar_lea.vmem %s3, %s474
      $region44: #{conv_layer_forward.1} parent=39 // pred_fallthru
        _
    $region40: #{conv_layer_forward.1} parent=5 // pred_fallthru
      _
  $region6: #{conv_layer_forward.1} parent=0 // loop_footer
    %s13 = sadd.s32 1, %s9
  $region7: #{conv_layer_forward.1} parent=0 // loop_footer_branch
    %8 = sbr.rel target = $region3
  $region8: #{conv_layer_forward.1} parent=0 // loop_exit
    _

</llo_original>
